<compile_context>
chip_gen: v7x
topology: tpu7x:2x2x1
jax: 0.10.0
libtpu: 0.0.40
codegen_flags: <defaults>
</compile_context>

<pallas_src>
import functools

import jax
import jax.numpy as jnp
import numpy as np
from jax.experimental import pallas as pl
from jax.experimental.pallas import tpu as pltpu


def _conv1x1_clamp_kernel(w_ref, x_ref, o_ref, *, min_value, max_value):
    """w_ref: (C,) f32 in SMEM; x_ref: (bn, C, S, L) VMEM; o_ref: (bn, 1, S, L).

    3-term VPU scalar-broadcast FMA (no MXU), clamp, one dense lane-full store.
    """
    C = x_ref.shape[1]
    # Hoist the SMEM scalar reads; each weight is read / broadcast exactly once.
    w = [w_ref[c] for c in range(C)]
    acc = w[0] * x_ref[:, 0:1, :, :]
    for c in range(1, C):
        acc = acc + w[c] * x_ref[:, c:c + 1, :, :]
    # clamp_min then clamp_max; if min > max this returns max everywhere,
    # exactly like torch.clamp_min followed by torch.clamp_max.
    o_ref[...] = jnp.minimum(jnp.maximum(acc, min_value),
                             max_value).astype(o_ref.dtype)


def _pick_batch_block(n, bytes_per_image, budget_bytes):
    """Largest divisor of n whose per-step block bytes stay under budget."""
    bn = 1
    for d in range(1, n + 1):
        if n % d == 0 and d * bytes_per_image <= budget_bytes:
            bn = d
    return bn


@functools.partial(jax.jit, static_argnames=("min_value", "max_value"))
def conv1x1_clamp(x_nchw, weight, *, min_value, max_value):
    """1x1 conv (C -> 1, padding=1, bias=False) + clamp_min/clamp_max.

    x_nchw: (N, C, H, W) float32
    weight: (1, C, 1, 1) float32
    returns (N, 1, H+2, W+2) float32 (matches PyTorch padding=1 output).
    """
    N, C, H, W = x_nchw.shape
    HW = H * W

    # Border of a 1x1 conv over zero padding, no bias -> 0, then both clamps.
    pad_value = float(min(max(0.0, min_value), max_value))

    w_smem = weight.reshape(C).astype(jnp.float32)

    # Lane-dense spatial view: (S, 128) slabs fill every vreg completely.
    if HW % 128 == 0:
        S, L = HW // 128, 128
    else:
        S, L = H, W            # fallback: full-extent block, still legal
    x_view = x_nchw.reshape(N, C, S, L)

    # 4 MiB per-step block budget: double-buffered in+out stays well inside
    # v5e's 16 MiB default scoped VMEM (and trivially inside v6e/v7x limits).
    bytes_per_image = 4 * (C * HW + HW)
    bn = _pick_batch_block(N, bytes_per_image, budget_bytes=4 * 1024 * 1024)
    nb = N // bn

    # Spatial "parallel" axis so the v7x second TensorCore has work when the
    # batch axis has a single step; gated so the ~0.35 us/step overhead is
    # amortized (>= 512 KiB of input per step) and sublane alignment holds.
    sp = 1
    if nb == 1 and S % 16 == 0:
        if bn * C * (S // 2) * L * 4 >= 512 * 1024:
            sp = 2
    s_blk = S // sp

    kernel = functools.partial(_conv1x1_clamp_kernel,
                               min_value=min_value, max_value=max_value)
    out_flat = pl.pallas_call(
        kernel,
        out_shape=jax.ShapeDtypeStruct((N, 1, S, L), jnp.float32),
        grid_spec=pltpu.PrefetchScalarGridSpec(
            num_scalar_prefetch=0,
            grid=(nb, sp),
            in_specs=[
                # 3 scalar weights live in SMEM (scalar-broadcast FMA source).
                pl.BlockSpec(memory_space=pltpu.MemorySpace.SMEM),
                pl.BlockSpec((bn, C, s_blk, L), lambda n, s: (n, 0, s, 0)),
            ],
            out_specs=pl.BlockSpec((bn, 1, s_blk, L),
                                   lambda n, s: (n, 0, s, 0)),
        ),
        compiler_params=pltpu.CompilerParams(
            dimension_semantics=("parallel", "parallel")),
    )(w_smem, x_view)

    # Dense kernel output; the constant 2-pixel border is one cheap XLA pad.
    out = out_flat.reshape(N, 1, H, W)
    return jnp.pad(out, ((0, 0), (0, 0), (1, 1), (1, 1)),
                   constant_values=pad_value)


if __name__ == "__main__":
    min_value = 0.2
    max_value = 0.4

    key = jax.random.PRNGKey(0)
    kx, kw = jax.random.split(key)

    # Matches the spec's x1 = torch.randn(1, 3, 64, 64).
    N, C, H, W = 1, 3, 64, 64
    x = jax.random.normal(kx, (N, C, H, W), dtype=jnp.float32)
    # Deterministic synthetic conv weight, shape (out_ch=1, in_ch=C, 1, 1).
    weight = jax.random.normal(kw, (1, C, 1, 1), dtype=jnp.float32) * 0.5

    out = conv1x1_clamp(x, weight, min_value=min_value, max_value=max_value)
    out = jax.block_until_ready(out)

    # pure-JAX reference
    ref_core = jnp.einsum("nchw,oc->nohw", x, weight.reshape(1, C))
    ref_core = jnp.clip(ref_core, min_value, max_value)
    pad_val = float(np.clip(0.0, min_value, max_value))
    ref = jnp.pad(ref_core, ((0, 0), (0, 0), (1, 1), (1, 1)),
                  constant_values=pad_val)
    np.testing.assert_allclose(np.asarray(out), np.asarray(ref),
                               rtol=1e-5, atol=1e-5)
    assert out.shape == (N, 1, H + 2, W + 2)

    print("KERNEL_OK")
</pallas_src>

<mosaic_0001>
module attributes {stable_mosaic.version = 11 : i64} {
  func.func @_conv1x1_clamp_kernel(%arg0: i32, %arg1: i32, %arg2: memref<3xf32, #tpu.memory_space<smem>>, %arg3: memref<1x3x32x128xf32, #tpu.memory_space<vmem>>, %arg4: memref<1x1x32x128xf32, #tpu.memory_space<vmem>>) attributes {dimension_semantics = [#tpu.dimension_semantics<parallel>, #tpu.dimension_semantics<parallel>], iteration_bounds = array<i64: 1, 1>, scalar_prefetch = 0 : i64, scratch_operands = 0 : i64, tpu.core_type = #tpu.core_type<tc>, window_params = [{transform_indices = @transform_0, window_bounds = array<i64: 3>}, {transform_indices = @transform_1, window_bounds = array<i64: 1, 3, 32, 128>}, {transform_indices = @transform_2, window_bounds = array<i64: 1, 1, 32, 128>}]} {
    %c0 = arith.constant 0 : index
    %0 = memref.load %arg2[%c0] : memref<3xf32, #tpu.memory_space<smem>>
    %c1 = arith.constant 1 : index
    %1 = memref.load %arg2[%c1] : memref<3xf32, #tpu.memory_space<smem>>
    %c2 = arith.constant 2 : index
    %2 = memref.load %arg2[%c2] : memref<3xf32, #tpu.memory_space<smem>>
    %c0_0 = arith.constant 0 : index
    %c0_1 = arith.constant 0 : index
    %c0_2 = arith.constant 0 : index
    %c0_3 = arith.constant 0 : index
    %3 = vector.load %arg3[%c0_0, %c0_1, %c0_2, %c0_3] : memref<1x3x32x128xf32, #tpu.memory_space<vmem>>, vector<1x1x32x128xf32>
    %4 = vector.broadcast %0 : f32 to vector<1x1x32x128xf32>
    %5 = arith.mulf %4, %3 : vector<1x1x32x128xf32>
    %c0_4 = arith.constant 0 : index
    %c1_5 = arith.constant 1 : index
    %c0_6 = arith.constant 0 : index
    %c0_7 = arith.constant 0 : index
    %6 = vector.load %arg3[%c0_4, %c1_5, %c0_6, %c0_7] : memref<1x3x32x128xf32, #tpu.memory_space<vmem>>, vector<1x1x32x128xf32>
    %7 = vector.broadcast %1 : f32 to vector<1x1x32x128xf32>
    %8 = arith.mulf %7, %6 : vector<1x1x32x128xf32>
    %9 = arith.addf %5, %8 : vector<1x1x32x128xf32>
    %c0_8 = arith.constant 0 : index
    %c2_9 = arith.constant 2 : index
    %c0_10 = arith.constant 0 : index
    %c0_11 = arith.constant 0 : index
    %10 = vector.load %arg3[%c0_8, %c2_9, %c0_10, %c0_11] : memref<1x3x32x128xf32, #tpu.memory_space<vmem>>, vector<1x1x32x128xf32>
    %11 = vector.broadcast %2 : f32 to vector<1x1x32x128xf32>
    %12 = arith.mulf %11, %10 : vector<1x1x32x128xf32>
    %13 = arith.addf %9, %12 : vector<1x1x32x128xf32>
    %cst = arith.constant 2.000000e-01 : f32
    %14 = vector.broadcast %cst : f32 to vector<1x1x32x128xf32>
    %15 = arith.maximumf %13, %14 : vector<1x1x32x128xf32>
    %cst_12 = arith.constant 4.000000e-01 : f32
    %16 = vector.broadcast %cst_12 : f32 to vector<1x1x32x128xf32>
    %17 = arith.minimumf %15, %16 : vector<1x1x32x128xf32>
    %c0_13 = arith.constant 0 : index
    %c0_14 = arith.constant 0 : index
    %c0_15 = arith.constant 0 : index
    %c0_16 = arith.constant 0 : index
    %18 = vector.load %arg4[%c0_13, %c0_14, %c0_15, %c0_16] : memref<1x1x32x128xf32, #tpu.memory_space<vmem>>, vector<1x1x32x128xf32>
    tpu.vector_store %arg4[%c0_13, %c0_14, %c0_15, %c0_16], %17 {strides = array<i32>} : memref<1x1x32x128xf32, #tpu.memory_space<vmem>>, vector<1x1x32x128xf32>,
    return
  }
  func.func @transform_0(%arg0: i32, %arg1: i32) -> i32 {
    %c0_i32 = arith.constant 0 : i32
    %c0_i32_0 = arith.constant 0 : i32
    return %c0_i32 : i32
  }
  func.func @transform_1(%arg0: i32, %arg1: i32) -> (i32, i32, i32, i32) {
    %c0_i32 = arith.constant 0 : i32
    %c0_i32_0 = arith.constant 0 : i32
    %c0_i32_1 = arith.constant 0 : i32
    return %arg0, %c0_i32, %arg1, %c0_i32_0 : i32, i32, i32, i32
  }
  func.func @transform_2(%arg0: i32, %arg1: i32) -> (i32, i32, i32, i32) {
    %c0_i32 = arith.constant 0 : i32
    %c0_i32_0 = arith.constant 0 : i32
    %c0_i32_1 = arith.constant 0 : i32
    return %arg0, %c0_i32, %arg1, %c0_i32_0 : i32, i32, i32, i32
  }
}

</mosaic_0001>

<llo_original>
// kernel: conv1x1_clamp.1
$region0: #{conv1x1_clamp.1}
  #allocation0 [shape = 'u32[]', space=smem, size = 0x4, offset = 0x4, fixed_abs, tag = 'smem constant byte address 0x4 - core index']
  #allocation1 [shape = 'u32[144,128]{1,0:T(1,128)}', space=vmem, size = 0x12000, scoped, tag = 'internal scratch']
  %s0 = inlined_call_operand.vmem [shape: f32[3], index: 0, kind: input, shape index: {}]
  %s1 = inlined_call_operand.vmem [shape: f32[1,3,32,128], index: 1, kind: input, shape index: {}]
  %s2 = inlined_call_operand.vmem [shape: f32[1,1,32,128], index: 2, kind: output, shape index: {}]
  %s3 = sld [smem:[#allocation0]]
  $region22: #{conv1x1_clamp.1} parent=0
    _
  %s5 = ssub.s32 1, %s3
  %s6 = scalar_select 0, %s5, %s3
  $region1: #{conv1x1_clamp.1} parent=0
    #allocation2 [shape = 'u8[512]{0}', space=smem, size = 0x200, scoped, tag = 'input window, operand 0, single buffered']
    #allocation3 [shape = 's32[1]{0}', space=sflag, size = 0x4, scoped, tag = 'scoped memory for conv1x1_clamp.1']
    %7 = vsyncpa [#allocation3], 0
    // Predicated region
    $region2: #{conv1x1_clamp.1} parent=1 // pred_check
      _
    $region3: #{conv1x1_clamp.1} parent=1 // pred_check_branch
      %9 = sbr.rel (0) target = $region5
    $region4: #{conv1x1_clamp.1} parent=1 // pred_region
      %s11 = ssub.s32 16, 16
      %12 = vsyncadd [#allocation3], %s11
      %s14 = sshll.u32 %s0, 4
      %s15 = int_to_ptr.vmem [resolvable:$true] %s14
      %17 = dma.vmem_to_smem %s15, 16, [#allocation2], [#allocation3]
    $region5: #{conv1x1_clamp.1} parent=1 // pred_fallthru
      _
    // Predicated region
    $region6: #{conv1x1_clamp.1} parent=1 // pred_check
      _
    $region7: #{conv1x1_clamp.1} parent=1 // pred_check_branch
      %19 = sbr.rel (0) target = $region9
    $region8: #{conv1x1_clamp.1} parent=1 // pred_region
      _
    $region9: #{conv1x1_clamp.1} parent=1 // pred_fallthru
      _
    // Predicated region
    $region10: #{conv1x1_clamp.1} parent=1 // pred_check
      _
    $region11: #{conv1x1_clamp.1} parent=1 // pred_check_branch
      %21 = sbr.rel (0) target = $region13
    $region12: #{conv1x1_clamp.1} parent=1 // pred_region
      %22 = dma.done [#allocation3], 16
    $region13: #{conv1x1_clamp.1} parent=1 // pred_fallthru
      _
    %23 = sfence
    %s24 = sld [smem:[#allocation2]]
    %s25 = sld [smem:[#allocation2 + $0x1]]
    %s26 = sld [smem:[#allocation2 + $0x2]]
    %v27 = vld [vmem:[%s1] sm:$0xff]
    %v28 = vld [vmem:[%s1 + $0x8] sm:$0xff]
    %v29 = vld [vmem:[%s1 + $0x10] sm:$0xff]
    %v30 = vld [vmem:[%s1 + $0x18] sm:$0xff]
    %v31 = vstv %s24
    %v32 = vmul.f32 %v31, %v27
    %v33 = vmul.f32 %v31, %v28
    %v34 = vmul.f32 %v31, %v29
    %v35 = vmul.f32 %v31, %v30
    %s36 = scalar_lea.vmem %s1, 32
    %v37 = vld [vmem:[%s36] sm:$0xff]
    %v38 = vld [vmem:[%s36 + $0x8] sm:$0xff]
    %v39 = vld [vmem:[%s36 + $0x10] sm:$0xff]
    %v40 = vld [vmem:[%s36 + $0x18] sm:$0xff]
    %v41 = vstv %s25
    %v42 = vmul.f32 %v41, %v37
    %v43 = vmul.f32 %v41, %v38
    %v44 = vmul.f32 %v41, %v39
    %v45 = vmul.f32 %v41, %v40
    %v46 = vadd.f32 %v32, %v42
    %v47 = vadd.f32 %v33, %v43
    %v48 = vadd.f32 %v34, %v44
    %v49 = vadd.f32 %v35, %v45
    %s50 = scalar_lea.vmem %s1, 64
    %v51 = vld [vmem:[%s50] sm:$0xff]
    %v52 = vld [vmem:[%s50 + $0x8] sm:$0xff]
    %v53 = vld [vmem:[%s50 + $0x10] sm:$0xff]
    %v54 = vld [vmem:[%s50 + $0x18] sm:$0xff]
    %v55 = vstv %s26
    %v56 = vmul.f32 %v55, %v51
    %v57 = vmul.f32 %v55, %v52
    %v58 = vmul.f32 %v55, %v53
    %v59 = vmul.f32 %v55, %v54
    %v60 = vadd.f32 %v46, %v56
    %v61 = vadd.f32 %v47, %v57
    %v62 = vadd.f32 %v48, %v58
    %v63 = vadd.f32 %v49, %v59
    %v64 = vmax.f32 %v60, 0.2
    %v65 = vmax.f32 %v61, 0.2
    %v66 = vmax.f32 %v62, 0.2
    %v67 = vmax.f32 %v63, 0.2
    %v68 = vmin.f32 %v64, 0.4
    %v69 = vmin.f32 %v65, 0.4
    %v70 = vmin.f32 %v66, 0.4
    %v71 = vmin.f32 %v67, 0.4
    %72 = vst [vmem:[%s2] sm:$0xff] %v68
    %73 = vst [vmem:[%s2 + $0x8] sm:$0xff] %v69
    %74 = vst [vmem:[%s2 + $0x10] sm:$0xff] %v70
    %75 = vst [vmem:[%s2 + $0x18] sm:$0xff] %v71
    // Predicated region
    $region14: #{conv1x1_clamp.1} parent=1 // pred_check
      _
    $region15: #{conv1x1_clamp.1} parent=1 // pred_check_branch
      %77 = sbr.rel (0) target = $region17
    $region16: #{conv1x1_clamp.1} parent=1 // pred_region
      _
    $region17: #{conv1x1_clamp.1} parent=1 // pred_fallthru
      _
    // Predicated region
    $region18: #{conv1x1_clamp.1} parent=1 // pred_check
      _
    $region19: #{conv1x1_clamp.1} parent=1 // pred_check_branch
      %79 = sbr.rel (0) target = $region21
    $region20: #{conv1x1_clamp.1} parent=1 // pred_region
      _
    $region21: #{conv1x1_clamp.1} parent=1 // pred_fallthru
      _
    %80 = vsyncpa [#allocation3], 1

</llo_original>
